<compile_context>
chip_gen: v5e
topology: v5e:2x2
jax: 0.10.0
libtpu: 0.0.40
codegen_flags: <defaults>
</compile_context>

<pallas_src>
import jax
import jax.numpy as jnp
from jax.experimental import pallas as pl
from jax.experimental.pallas import tpu as pltpu  # noqa: F401  (TPU backend)

LANES = 128
KH = KW = 3            # 3x3 SAME conv
N_LANDMARKS = 2


def prepare_params(params):
    """One-time (model-load) parameter prep — NOT on the per-forward path.

    Returns:
      wc_mat: (9*C_in, C_out) f32  conv weights flattened for the im2col matmul
      bc_row: (1, C_out)      f32  conv bias
      wh_pad: (C_out, 128)    f32  head weights, lane-padded to 128
      bh_pad: (1, 128)        f32  head bias, lane-padded to 128
    """
    wc, bc, wh, bh = params                     # (3,3,C,Co), (Co,), (Co,2), (2,)
    kh, kw, C, C_out = wc.shape
    n_out = wh.shape[1]
    wc_mat = jnp.asarray(wc, jnp.float32).reshape(kh * kw * C, C_out)
    bc_row = jnp.asarray(bc, jnp.float32).reshape(1, C_out)
    wh_pad = jnp.zeros((C_out, LANES), jnp.float32).at[:, :n_out].set(
        jnp.asarray(wh, jnp.float32))
    bh_pad = jnp.zeros((1, LANES), jnp.float32).at[:, :n_out].set(
        jnp.asarray(bh, jnp.float32).reshape(1, n_out))
    return wc_mat, bc_row, wh_pad, bh_pad


def model_wrapper_forward(x_nchw, prepped):
    """Equivalent of ModelWrapper(model).forward(input_data).

    x_nchw:  (B, C_in, H, W) float32  (PyTorch NCHW convention)
    prepped: output of prepare_params()
    returns: (B, 2) float32 landmarks
    """
    wc_mat, bc_row, wh_pad, bh_pad = prepped
    B, C, H, W = x_nchw.shape
    KK, C_out = wc_mat.shape                     # KK = 9 * C_in
    P = H * W
    M = B * P
    inv_p = 1.0 / float(P)

    # --- input prep (tiny; fused by XLA under jit): NHWC, halo pad, im2col ---
    x_nhwc = jnp.transpose(x_nchw, (0, 2, 3, 1)).astype(jnp.float32)
    x_hal = jnp.pad(x_nhwc, ((0, 0), (1, 1), (1, 1), (0, 0)))
    # Tap order (dy, dx) outer, channel inner -> matches wc.reshape(9*C, C_out).
    cols = jnp.concatenate(
        [x_hal[:, dy:dy + H, dx:dx + W, :]
         for dy in range(KH) for dx in range(KW)], axis=-1)      # (B, H, W, 9*C)
    x_col = cols.reshape(M, KK)                                  # lane-dense LHS

    def kernel(x_ref, wc_ref, bc_ref, wh_ref, bh_ref, o_ref):
        # x_ref:(M,KK) wc_ref:(KK,Co) bc_ref:(1,Co) wh_ref:(Co,128) bh_ref:(1,128)
        # o_ref:(B,128)  — whole batch, single grid step, all f32.
        acc = jnp.dot(x_ref[...], wc_ref[...],
                      preferred_element_type=jnp.float32)        # one MXU pass
        h = jnp.maximum(acc + bc_ref[...], 0.0)                  # bias + ReLU
        # Global average pool: per-image sum over the P rows, then scale by 1/P.
        pooled = jnp.sum(h.reshape(B, P, C_out), axis=1) * inv_p  # (B, C_out)
        o_ref[...] = (jnp.dot(pooled, wh_ref[...],
                              preferred_element_type=jnp.float32)
                      + bh_ref[...])                             # (B, 128) lane-dense

    out_pad = pl.pallas_call(
        kernel,
        out_shape=jax.ShapeDtypeStruct((B, LANES), jnp.float32),
        grid=(1,),                    # whole batch in one step: no per-image
                                      # grid overhead on single-TC chips
        in_specs=[
            pl.BlockSpec((M, KK), lambda i: (0, 0)),             # im2col LHS
            pl.BlockSpec((KK, C_out), lambda i: (0, 0)),         # conv weights
            pl.BlockSpec((1, C_out), lambda i: (0, 0)),          # conv bias
            pl.BlockSpec((C_out, LANES), lambda i: (0, 0)),      # head weights
            pl.BlockSpec((1, LANES), lambda i: (0, 0)),          # head bias
        ],
        out_specs=pl.BlockSpec((B, LANES), lambda i: (0, 0)),
    )(x_col, wc_mat, bc_row, wh_pad, bh_pad)

    return out_pad[:, :N_LANDMARKS]                              # (B, 2)


def reference_forward(x_nchw, params):
    """Pure-JAX reference (lax.conv, f32) for correctness check."""
    wc, bc, wh, bh = params
    x_nhwc = jnp.transpose(x_nchw, (0, 2, 3, 1))
    h = jax.lax.conv_general_dilated(
        x_nhwc, wc, window_strides=(1, 1), padding="SAME",
        dimension_numbers=("NHWC", "HWIO", "NHWC"))
    h = jnp.maximum(h + bc, 0.0)
    pooled = jnp.mean(h, axis=(1, 2))
    return pooled @ wh + bh


if __name__ == "__main__":
    key = jax.random.PRNGKey(0)
    k_x, k_wc, k_bc, k_wh, k_bh = jax.random.split(key, 5)

    B, C_in, H, W = 2, 4, 16, 16
    C_out = 32

    x = jax.random.normal(k_x, (B, C_in, H, W), dtype=jnp.float32)

    # Deterministic synthetic parameters (shapes dictated by the wrapped model).
    wc = jax.random.normal(k_wc, (3, 3, C_in, C_out), dtype=jnp.float32) * 0.1
    bc = jax.random.normal(k_bc, (C_out,), dtype=jnp.float32) * 0.01
    wh = jax.random.normal(k_wh, (C_out, 2), dtype=jnp.float32) * 0.1
    bh = jax.random.normal(k_bh, (2,), dtype=jnp.float32) * 0.01
    params = (wc, bc, wh, bh)

    prepped = prepare_params(params)     # model-load-time prep (runs once)

    forward = jax.jit(model_wrapper_forward)
    out = jax.block_until_ready(forward(x, prepped))

    ref = jax.block_until_ready(reference_forward(x, params))
    assert out.shape == (B, 2)
    # MXU default-precision f32 matmuls vs. the pure-f32 XLA conv reference.
    assert jnp.allclose(out, ref, atol=2e-2, rtol=2e-2), (out, ref)

    # TODO(synk): fit/valid/predict/save/trace_save/save_to_onnx/load are
    # training / IO orchestration with no Pallas equivalent; only forward() is
    # implemented as a kernel.
    print("KERNEL_OK")
</pallas_src>

<mosaic_0001>
module attributes {stable_mosaic.version = 11 : i64} {
  func.func @kernel(%arg0: i32, %arg1: memref<512x36xf32, #tpu.memory_space<vmem>>, %arg2: memref<36x32xf32, #tpu.memory_space<vmem>>, %arg3: memref<1x32xf32, #tpu.memory_space<vmem>>, %arg4: memref<32x128xf32, #tpu.memory_space<vmem>>, %arg5: memref<1x128xf32, #tpu.memory_space<vmem>>, %arg6: memref<2x128xf32, #tpu.memory_space<vmem>>) attributes {dimension_semantics = [#tpu.dimension_semantics<arbitrary>], iteration_bounds = array<i64: 1>, scalar_prefetch = 0 : i64, scratch_operands = 0 : i64, tpu.core_type = #tpu.core_type<tc>, window_params = [{pipeline_mode = #tpu.pipeline_mode<synchronous>, transform_indices = @transform_0, window_bounds = array<i64: 512, 36>}, {pipeline_mode = #tpu.pipeline_mode<synchronous>, transform_indices = @transform_1, window_bounds = array<i64: 36, 32>}, {pipeline_mode = #tpu.pipeline_mode<synchronous>, transform_indices = @transform_2, window_bounds = array<i64: 1, 32>}, {pipeline_mode = #tpu.pipeline_mode<synchronous>, transform_indices = @transform_3, window_bounds = array<i64: 32, 128>}, {pipeline_mode = #tpu.pipeline_mode<synchronous>, transform_indices = @transform_4, window_bounds = array<i64: 1, 128>}, {pipeline_mode = #tpu.pipeline_mode<synchronous>, transform_indices = @transform_5, window_bounds = array<i64: 2, 128>}]} {
    %c0 = arith.constant 0 : index
    %c0_0 = arith.constant 0 : index
    %0 = vector.load %arg1[%c0, %c0_0] : memref<512x36xf32, #tpu.memory_space<vmem>>, vector<512x36xf32>
    %c0_1 = arith.constant 0 : index
    %c0_2 = arith.constant 0 : index
    %1 = vector.load %arg2[%c0_1, %c0_2] : memref<36x32xf32, #tpu.memory_space<vmem>>, vector<36x32xf32>
    %cst = arith.constant dense<0.000000e+00> : vector<512x32xf32>
    %2 = tpu.matmul %0, %1, %cst {dimension_numbers = #tpu.dot_dimension_numbers<[1], [0], [0], [1], [0, 0, 1, 1], [], []>} : vector<512x36xf32>, vector<36x32xf32>, vector<512x32xf32> -> vector<512x32xf32>
    %c0_3 = arith.constant 0 : index
    %c0_4 = arith.constant 0 : index
    %3 = vector.load %arg3[%c0_3, %c0_4] : memref<1x32xf32, #tpu.memory_space<vmem>>, vector<1x32xf32>
    %4 = vector.broadcast %3 : vector<1x32xf32> to vector<512x32xf32>
    %5 = arith.addf %2, %4 : vector<512x32xf32>
    %cst_5 = arith.constant 0.000000e+00 : f32
    %6 = vector.broadcast %cst_5 : f32 to vector<512x32xf32>
    %7 = arith.maximumf %5, %6 : vector<512x32xf32>
    %8 = vector.shape_cast %7 : vector<512x32xf32> to vector<2x256x32xf32>
    %cst_6 = arith.constant dense<0.000000e+00> : vector<2x32xf32>
    %9 = vector.multi_reduction <add>, %8, %cst_6 [1] : vector<2x256x32xf32> to vector<2x32xf32>
    %cst_7 = arith.constant 3.906250e-03 : f32
    %10 = vector.broadcast %cst_7 : f32 to vector<2x32xf32>
    %11 = arith.mulf %9, %10 : vector<2x32xf32>
    %c0_8 = arith.constant 0 : index
    %c0_9 = arith.constant 0 : index
    %12 = vector.load %arg4[%c0_8, %c0_9] : memref<32x128xf32, #tpu.memory_space<vmem>>, vector<32x128xf32>
    %cst_10 = arith.constant dense<0.000000e+00> : vector<2x128xf32>
    %13 = tpu.matmul %11, %12, %cst_10 {dimension_numbers = #tpu.dot_dimension_numbers<[1], [0], [0], [1], [0, 0, 1, 1], [], []>} : vector<2x32xf32>, vector<32x128xf32>, vector<2x128xf32> -> vector<2x128xf32>
    %c0_11 = arith.constant 0 : index
    %c0_12 = arith.constant 0 : index
    %14 = vector.load %arg5[%c0_11, %c0_12] : memref<1x128xf32, #tpu.memory_space<vmem>>, vector<1x128xf32>
    %15 = vector.broadcast %14 : vector<1x128xf32> to vector<2x128xf32>
    %16 = arith.addf %13, %15 : vector<2x128xf32>
    %c0_13 = arith.constant 0 : index
    %c0_14 = arith.constant 0 : index
    %17 = vector.load %arg6[%c0_13, %c0_14] : memref<2x128xf32, #tpu.memory_space<vmem>>, vector<2x128xf32>
    tpu.vector_store %arg6[%c0_13, %c0_14], %16 {strides = array<i32>} : memref<2x128xf32, #tpu.memory_space<vmem>>, vector<2x128xf32>,
    return
  }
  func.func @transform_0(%arg0: i32) -> (i32, i32) {
    %c0_i32 = arith.constant 0 : i32
    %c0_i32_0 = arith.constant 0 : i32
    %c0_i32_1 = arith.constant 0 : i32
    return %c0_i32, %c0_i32_0 : i32, i32
  }
  func.func @transform_1(%arg0: i32) -> (i32, i32) {
    %c0_i32 = arith.constant 0 : i32
    %c0_i32_0 = arith.constant 0 : i32
    %c0_i32_1 = arith.constant 0 : i32
    return %c0_i32, %c0_i32_0 : i32, i32
  }
  func.func @transform_2(%arg0: i32) -> (i32, i32) {
    %c0_i32 = arith.constant 0 : i32
    %c0_i32_0 = arith.constant 0 : i32
    %c0_i32_1 = arith.constant 0 : i32
    return %c0_i32, %c0_i32_0 : i32, i32
  }
  func.func @transform_3(%arg0: i32) -> (i32, i32) {
    %c0_i32 = arith.constant 0 : i32
    %c0_i32_0 = arith.constant 0 : i32
    %c0_i32_1 = arith.constant 0 : i32
    return %c0_i32, %c0_i32_0 : i32, i32
  }
  func.func @transform_4(%arg0: i32) -> (i32, i32) {
    %c0_i32 = arith.constant 0 : i32
    %c0_i32_0 = arith.constant 0 : i32
    %c0_i32_1 = arith.constant 0 : i32
    return %c0_i32, %c0_i32_0 : i32, i32
  }
  func.func @transform_5(%arg0: i32) -> (i32, i32) {
    %c0_i32 = arith.constant 0 : i32
    %c0_i32_0 = arith.constant 0 : i32
    %c0_i32_1 = arith.constant 0 : i32
    return %c0_i32, %c0_i32_0 : i32, i32
  }
}

</mosaic_0001>

<llo_original>
// kernel: model_wrapper_forward.1
$region0: #{model_wrapper_forward.1}
  #allocation0 [shape = 'u32[]', space=smem, size = 0x4, offset = 0x4, fixed_abs, tag = 'smem constant byte address 0x4 - core index']
  #allocation1 [shape = 'u32[72,128]{1,0:T(1,128)}', space=vmem, size = 0x9000, scoped, tag = 'internal scratch']
  %s0 = inlined_call_operand.vmem [shape: f32[512,36], index: 0, kind: input, shape index: {}]
  %s1 = inlined_call_operand.vmem [shape: f32[36,32], index: 1, kind: input, shape index: {}]
  %s2 = inlined_call_operand.vmem [shape: f32[1,32], index: 2, kind: input, shape index: {}]
  %s3 = inlined_call_operand.vmem [shape: f32[32,128], index: 3, kind: input, shape index: {}]
  %s4 = inlined_call_operand.vmem [shape: f32[1,128], index: 4, kind: input, shape index: {}]
  %s5 = inlined_call_operand.hbm [shape: f32[2,128], index: 5, kind: output, shape index: {}]
  %s6 = sld [smem:[#allocation0]]
  $region30: #{model_wrapper_forward.1} parent=0
    _
  %s8 = ssub.s32 1, %s6
  %s9 = scalar_select 0, %s8, %s6
  $region1: #{model_wrapper_forward.1} parent=0
    #allocation2 [shape = 'u8[1024]{0}', space=vmem, size = 0x400, scoped, tag = 'output window, operand 0, single buffered']
    #allocation3 [shape = 's32[1]{0}', space=sflag, size = 0x4, scoped, tag = 'scoped memory for model_wrapper_forward.1']
    %10 = vsyncpa [#allocation3], 0
    // Predicated region
    $region2: #{model_wrapper_forward.1} parent=1 // pred_check
      _
    $region3: #{model_wrapper_forward.1} parent=1 // pred_check_branch
      %12 = sbr.rel (0) target = $region5
    $region4: #{model_wrapper_forward.1} parent=1 // pred_region
      _
    $region5: #{model_wrapper_forward.1} parent=1 // pred_fallthru
      _
    // Predicated region
    $region6: #{model_wrapper_forward.1} parent=1 // pred_check
      _
    $region7: #{model_wrapper_forward.1} parent=1 // pred_check_branch
      %14 = sbr.rel (0) target = $region9
    $region8: #{model_wrapper_forward.1} parent=1 // pred_region
      _
    $region9: #{model_wrapper_forward.1} parent=1 // pred_fallthru
      _
    // Predicated region
    $region10: #{model_wrapper_forward.1} parent=1 // pred_check
      _
    $region11: #{model_wrapper_forward.1} parent=1 // pred_check_branch
      %16 = sbr.rel (0) target = $region13
    $region12: #{model_wrapper_forward.1} parent=1 // pred_region
      _
    $region13: #{model_wrapper_forward.1} parent=1 // pred_fallthru
      _
    // Predicated region
    $region14: #{model_wrapper_forward.1} parent=1 // pred_check
      _
    $region15: #{model_wrapper_forward.1} parent=1 // pred_check_branch
      %18 = sbr.rel (0) target = $region17
    $region16: #{model_wrapper_forward.1} parent=1 // pred_region
      _
    $region17: #{model_wrapper_forward.1} parent=1 // pred_fallthru
      _
    // Predicated region
    $region18: #{model_wrapper_forward.1} parent=1 // pred_check
      _
    $region19: #{model_wrapper_forward.1} parent=1 // pred_check_branch
      %20 = sbr.rel (0) target = $region21
    $region20: #{model_wrapper_forward.1} parent=1 // pred_region
      _
    $region21: #{model_wrapper_forward.1} parent=1 // pred_fallthru
      _
    %v21 = vld [vmem:[%s0] sm:$0xff]
    %v22 = vld [vmem:[%s0 + $0x8] sm:$0xff]
    %v23 = vld [vmem:[%s0 + $0x10] sm:$0xff]
    %v24 = vld [vmem:[%s0 + $0x18] sm:$0xff]
    %v25 = vld [vmem:[%s0 + $0x20] sm:$0xff]
    %v26 = vld [vmem:[%s0 + $0x28] sm:$0xff]
    %v27 = vld [vmem:[%s0 + $0x30] sm:$0xff]
    %v28 = vld [vmem:[%s0 + $0x38] sm:$0xff]
    %v29 = vld [vmem:[%s0 + $0x40] sm:$0xff]
    %v30 = vld [vmem:[%s0 + $0x48] sm:$0xff]
    %v31 = vld [vmem:[%s0 + $0x50] sm:$0xff]
    %v32 = vld [vmem:[%s0 + $0x58] sm:$0xff]
    %v33 = vld [vmem:[%s0 + $0x60] sm:$0xff]
    %v34 = vld [vmem:[%s0 + $0x68] sm:$0xff]
    %v35 = vld [vmem:[%s0 + $0x70] sm:$0xff]
    %v36 = vld [vmem:[%s0 + $0x78] sm:$0xff]
    %v37 = vld [vmem:[%s0 + $0x80] sm:$0xff]
    %v38 = vld [vmem:[%s0 + $0x88] sm:$0xff]
    %v39 = vld [vmem:[%s0 + $0x90] sm:$0xff]
    %v40 = vld [vmem:[%s0 + $0x98] sm:$0xff]
    %v41 = vld [vmem:[%s0 + $0xa0] sm:$0xff]
    %v42 = vld [vmem:[%s0 + $0xa8] sm:$0xff]
    %v43 = vld [vmem:[%s0 + $0xb0] sm:$0xff]
    %v44 = vld [vmem:[%s0 + $0xb8] sm:$0xff]
    %v45 = vld [vmem:[%s0 + $0xc0] sm:$0xff]
    %v46 = vld [vmem:[%s0 + $0xc8] sm:$0xff]
    %v47 = vld [vmem:[%s0 + $0xd0] sm:$0xff]
    %v48 = vld [vmem:[%s0 + $0xd8] sm:$0xff]
    %v49 = vld [vmem:[%s0 + $0xe0] sm:$0xff]
    %v50 = vld [vmem:[%s0 + $0xe8] sm:$0xff]
    %v51 = vld [vmem:[%s0 + $0xf0] sm:$0xff]
    %v52 = vld [vmem:[%s0 + $0xf8] sm:$0xff]
    %v53 = vld [vmem:[%s0 + $0x100] sm:$0xff]
    %v54 = vld [vmem:[%s0 + $0x108] sm:$0xff]
    %v55 = vld [vmem:[%s0 + $0x110] sm:$0xff]
    %v56 = vld [vmem:[%s0 + $0x118] sm:$0xff]
    %v57 = vld [vmem:[%s0 + $0x120] sm:$0xff]
    %v58 = vld [vmem:[%s0 + $0x128] sm:$0xff]
    %v59 = vld [vmem:[%s0 + $0x130] sm:$0xff]
    %v60 = vld [vmem:[%s0 + $0x138] sm:$0xff]
    %v61 = vld [vmem:[%s0 + $0x140] sm:$0xff]
    %v62 = vld [vmem:[%s0 + $0x148] sm:$0xff]
    %v63 = vld [vmem:[%s0 + $0x150] sm:$0xff]
    %v64 = vld [vmem:[%s0 + $0x158] sm:$0xff]
    %v65 = vld [vmem:[%s0 + $0x160] sm:$0xff]
    %v66 = vld [vmem:[%s0 + $0x168] sm:$0xff]
    %v67 = vld [vmem:[%s0 + $0x170] sm:$0xff]
    %v68 = vld [vmem:[%s0 + $0x178] sm:$0xff]
    %v69 = vld [vmem:[%s0 + $0x180] sm:$0xff]
    %v70 = vld [vmem:[%s0 + $0x188] sm:$0xff]
    %v71 = vld [vmem:[%s0 + $0x190] sm:$0xff]
    %v72 = vld [vmem:[%s0 + $0x198] sm:$0xff]
    %v73 = vld [vmem:[%s0 + $0x1a0] sm:$0xff]
    %v74 = vld [vmem:[%s0 + $0x1a8] sm:$0xff]
    %v75 = vld [vmem:[%s0 + $0x1b0] sm:$0xff]
    %v76 = vld [vmem:[%s0 + $0x1b8] sm:$0xff]
    %v77 = vld [vmem:[%s0 + $0x1c0] sm:$0xff]
    %v78 = vld [vmem:[%s0 + $0x1c8] sm:$0xff]
    %v79 = vld [vmem:[%s0 + $0x1d0] sm:$0xff]
    %v80 = vld [vmem:[%s0 + $0x1d8] sm:$0xff]
    %v81 = vld [vmem:[%s0 + $0x1e0] sm:$0xff]
    %v82 = vld [vmem:[%s0 + $0x1e8] sm:$0xff]
    %v83 = vld [vmem:[%s0 + $0x1f0] sm:$0xff]
    %v84 = vld [vmem:[%s0 + $0x1f8] sm:$0xff]
    %v85 = vld [vmem:[%s1] sm:$0xff]
    %v86 = vld [vmem:[%s1 + $0x8] sm:$0xff]
    %v87 = vld [vmem:[%s1 + $0x10] sm:$0xff]
    %v88 = vld [vmem:[%s1 + $0x18] sm:$0xff]
    %v89 = vld [vmem:[%s1 + $0x20] sm:$0xf]
    %v90 = vld [vmem:[%s2] sm:$0x1]
    %v92 = vperm.slane %v90, 0
    %vm94 = vcmask 293888
    %v96 = vsel %vm94, %v21, 0
    %v99 = vsel %vm94, %v22, 0
    %v102 = vsel %vm94, %v23, 0
    %v105 = vsel %vm94, %v24, 0
    %v108 = vsel %vm94, %v25, 0
    %v111 = vsel %vm94, %v26, 0
    %v114 = vsel %vm94, %v27, 0
    %v117 = vsel %vm94, %v28, 0
    %v120 = vsel %vm94, %v29, 0
    %v123 = vsel %vm94, %v30, 0
    %v126 = vsel %vm94, %v31, 0
    %v129 = vsel %vm94, %v32, 0
    %v132 = vsel %vm94, %v33, 0
    %v135 = vsel %vm94, %v34, 0
    %v138 = vsel %vm94, %v35, 0
    %v141 = vsel %vm94, %v36, 0
    %v144 = vsel %vm94, %v37, 0
    %v147 = vsel %vm94, %v38, 0
    %v150 = vsel %vm94, %v39, 0
    %v153 = vsel %vm94, %v40, 0
    %v156 = vsel %vm94, %v41, 0
    %v159 = vsel %vm94, %v42, 0
    %v162 = vsel %vm94, %v43, 0
    %v165 = vsel %vm94, %v44, 0
    %v168 = vsel %vm94, %v45, 0
    %v171 = vsel %vm94, %v46, 0
    %v174 = vsel %vm94, %v47, 0
    %v177 = vsel %vm94, %v48, 0
    %v180 = vsel %vm94, %v49, 0
    %v183 = vsel %vm94, %v50, 0
    %v186 = vsel %vm94, %v51, 0
    %v189 = vsel %vm94, %v52, 0
    %v192 = vsel %vm94, %v53, 0
    %v195 = vsel %vm94, %v54, 0
    %v198 = vsel %vm94, %v55, 0
    %v201 = vsel %vm94, %v56, 0
    %v204 = vsel %vm94, %v57, 0
    %v207 = vsel %vm94, %v58, 0
    %v210 = vsel %vm94, %v59, 0
    %v213 = vsel %vm94, %v60, 0
    %v216 = vsel %vm94, %v61, 0
    %v219 = vsel %vm94, %v62, 0
    %v222 = vsel %vm94, %v63, 0
    %v225 = vsel %vm94, %v64, 0
    %v228 = vsel %vm94, %v65, 0
    %v231 = vsel %vm94, %v66, 0
    %v234 = vsel %vm94, %v67, 0
    %v237 = vsel %vm94, %v68, 0
    %v240 = vsel %vm94, %v69, 0
    %v243 = vsel %vm94, %v70, 0
    %v246 = vsel %vm94, %v71, 0
    %v249 = vsel %vm94, %v72, 0
    %v252 = vsel %vm94, %v73, 0
    %v255 = vsel %vm94, %v74, 0
    %v258 = vsel %vm94, %v75, 0
    %v261 = vsel %vm94, %v76, 0
    %v264 = vsel %vm94, %v77, 0
    %v267 = vsel %vm94, %v78, 0
    %v270 = vsel %vm94, %v79, 0
    %v273 = vsel %vm94, %v80, 0
    %v276 = vsel %vm94, %v81, 0
    %v279 = vsel %vm94, %v82, 0
    %v282 = vsel %vm94, %v83, 0
    %v285 = vsel %vm94, %v84, 0
    %vm287 = vcmask 1043456
    %v289 = vsel %vm287, %v89, 0
    %291 = vmatpush.msra.mxu0 0.0
    %292 = vmatpush.msra.mxu0 0.0
    %293 = vmatpush.msra.mxu0 0.0
    %294 = vmatpush.msra.mxu0 0.0
    %295 = vmatpush.msra.mxu0 0.0
    %296 = vmatpush.msra.mxu0 0.0
    %297 = vmatpush.msra.mxu0 0.0
    %298 = vmatpush.msra.mxu0 0.0
    %299 = vmatpush.msra.mxu0 0.0
    %300 = vmatpush.msra.mxu0 0.0
    %301 = vmatpush.msra.mxu0 0.0
    %302 = vmatpush.msra.mxu0 %v289
    %303 = vmatpush.msra.mxu0 %v88
    %304 = vmatpush.msra.mxu0 %v87
    %305 = vmatpush.msra.mxu0 %v86
    %306 = vmatpush.msra.mxu0 %v85
    %307 = vmatmul.f32.gmra.mxu0 %v96
    %v308 = vpop.f32.mrf.mxu0
    %v309 = vadd.f32 %v92, %v308
    %310 = vmatmul.f32.gmra.mxu0 %v99
    %v311 = vpop.f32.mrf.mxu0
    %v312 = vadd.f32 %v92, %v311
    %313 = vmatmul.f32.gmra.mxu0 %v102
    %v314 = vpop.f32.mrf.mxu0
    %v315 = vadd.f32 %v92, %v314
    %316 = vmatmul.f32.gmra.mxu0 %v105
    %v317 = vpop.f32.mrf.mxu0
    %v318 = vadd.f32 %v92, %v317
    %319 = vmatmul.f32.gmra.mxu0 %v108
    %v320 = vpop.f32.mrf.mxu0
    %v321 = vadd.f32 %v92, %v320
    %322 = vmatmul.f32.gmra.mxu0 %v111
    %v323 = vpop.f32.mrf.mxu0
    %v324 = vadd.f32 %v92, %v323
    %325 = vmatmul.f32.gmra.mxu0 %v114
    %v326 = vpop.f32.mrf.mxu0
    %v327 = vadd.f32 %v92, %v326
    %328 = vmatmul.f32.gmra.mxu0 %v117
    %v329 = vpop.f32.mrf.mxu0
    %v330 = vadd.f32 %v92, %v329
    %331 = vmatmul.f32.gmra.mxu0 %v120
    %v332 = vpop.f32.mrf.mxu0
    %v333 = vadd.f32 %v92, %v332
    %334 = vmatmul.f32.gmra.mxu0 %v123
    %v335 = vpop.f32.mrf.mxu0
    %v336 = vadd.f32 %v92, %v335
    %337 = vmatmul.f32.gmra.mxu0 %v126
    %v338 = vpop.f32.mrf.mxu0
    %v339 = vadd.f32 %v92, %v338
    %340 = vmatmul.f32.gmra.mxu0 %v129
    %v341 = vpop.f32.mrf.mxu0
    %v342 = vadd.f32 %v92, %v341
    %343 = vmatmul.f32.gmra.mxu0 %v132
    %v344 = vpop.f32.mrf.mxu0
    %v345 = vadd.f32 %v92, %v344
    %346 = vmatmul.f32.gmra.mxu0 %v135
    %v347 = vpop.f32.mrf.mxu0
    %v348 = vadd.f32 %v92, %v347
    %349 = vmatmul.f32.gmra.mxu0 %v138
    %v350 = vpop.f32.mrf.mxu0
    %v351 = vadd.f32 %v92, %v350
    %352 = vmatmul.f32.gmra.mxu0 %v141
    %v353 = vpop.f32.mrf.mxu0
    %v354 = vadd.f32 %v92, %v353
    %355 = vmatmul.f32.gmra.mxu0 %v144
    %v356 = vpop.f32.mrf.mxu0
    %v357 = vadd.f32 %v92, %v356
    %358 = vmatmul.f32.gmra.mxu0 %v147
    %v359 = vpop.f32.mrf.mxu0
    %v360 = vadd.f32 %v92, %v359
    %361 = vmatmul.f32.gmra.mxu0 %v150
    %v362 = vpop.f32.mrf.mxu0
    %v363 = vadd.f32 %v92, %v362
    %364 = vmatmul.f32.gmra.mxu0 %v153
    %v365 = vpop.f32.mrf.mxu0
    %v366 = vadd.f32 %v92, %v365
    %367 = vmatmul.f32.gmra.mxu0 %v156
    %v368 = vpop.f32.mrf.mxu0
    %v369 = vadd.f32 %v92, %v368
    %370 = vmatmul.f32.gmra.mxu0 %v159
    %v371 = vpop.f32.mrf.mxu0
    %v372 = vadd.f32 %v92, %v371
    %373 = vmatmul.f32.gmra.mxu0 %v162
    %v374 = vpop.f32.mrf.mxu0
    %v375 = vadd.f32 %v92, %v374
    %376 = vmatmul.f32.gmra.mxu0 %v165
    %v377 = vpop.f32.mrf.mxu0
    %v378 = vadd.f32 %v92, %v377
    %379 = vmatmul.f32.gmra.mxu0 %v168
    %v380 = vpop.f32.mrf.mxu0
    %v381 = vadd.f32 %v92, %v380
    %382 = vmatmul.f32.gmra.mxu0 %v171
    %v383 = vpop.f32.mrf.mxu0
    %v384 = vadd.f32 %v92, %v383
    %385 = vmatmul.f32.gmra.mxu0 %v174
    %v386 = vpop.f32.mrf.mxu0
    %v387 = vadd.f32 %v92, %v386
    %388 = vmatmul.f32.gmra.mxu0 %v177
    %v389 = vpop.f32.mrf.mxu0
    %v390 = vadd.f32 %v92, %v389
    %391 = vmatmul.f32.gmra.mxu0 %v180
    %v392 = vpop.f32.mrf.mxu0
    %v393 = vadd.f32 %v92, %v392
    %394 = vmatmul.f32.gmra.mxu0 %v183
    %v395 = vpop.f32.mrf.mxu0
    %v396 = vadd.f32 %v92, %v395
    %397 = vmatmul.f32.gmra.mxu0 %v186
    %v398 = vpop.f32.mrf.mxu0
    %v399 = vadd.f32 %v92, %v398
    %400 = vmatmul.f32.gmra.mxu0 %v189
    %v401 = vpop.f32.mrf.mxu0
    %v402 = vadd.f32 %v92, %v401
    %403 = vmatmul.f32.gmra.mxu0 %v192
    %v404 = vpop.f32.mrf.mxu0
    %v405 = vadd.f32 %v92, %v404
    %406 = vmatmul.f32.gmra.mxu0 %v195
    %v407 = vpop.f32.mrf.mxu0
    %v408 = vadd.f32 %v92, %v407
    %409 = vmatmul.f32.gmra.mxu0 %v198
    %v410 = vpop.f32.mrf.mxu0
    %v411 = vadd.f32 %v92, %v410
    %412 = vmatmul.f32.gmra.mxu0 %v201
    %v413 = vpop.f32.mrf.mxu0
    %v414 = vadd.f32 %v92, %v413
    %415 = vmatmul.f32.gmra.mxu0 %v204
    %v416 = vpop.f32.mrf.mxu0
    %v417 = vadd.f32 %v92, %v416
    %418 = vmatmul.f32.gmra.mxu0 %v207
    %v419 = vpop.f32.mrf.mxu0
    %v420 = vadd.f32 %v92, %v419
    %421 = vmatmul.f32.gmra.mxu0 %v210
    %v422 = vpop.f32.mrf.mxu0
    %v423 = vadd.f32 %v92, %v422
    %424 = vmatmul.f32.gmra.mxu0 %v213
    %v425 = vpop.f32.mrf.mxu0
    %v426 = vadd.f32 %v92, %v425
    %427 = vmatmul.f32.gmra.mxu0 %v216
    %v428 = vpop.f32.mrf.mxu0
    %v429 = vadd.f32 %v92, %v428
    %430 = vmatmul.f32.gmra.mxu0 %v219
    %v431 = vpop.f32.mrf.mxu0
    %v432 = vadd.f32 %v92, %v431
    %433 = vmatmul.f32.gmra.mxu0 %v222
    %v434 = vpop.f32.mrf.mxu0
    %v435 = vadd.f32 %v92, %v434
    %436 = vmatmul.f32.gmra.mxu0 %v225
    %v437 = vpop.f32.mrf.mxu0
    %v438 = vadd.f32 %v92, %v437
    %439 = vmatmul.f32.gmra.mxu0 %v228
    %v440 = vpop.f32.mrf.mxu0
    %v441 = vadd.f32 %v92, %v440
    %442 = vmatmul.f32.gmra.mxu0 %v231
    %v443 = vpop.f32.mrf.mxu0
    %v444 = vadd.f32 %v92, %v443
    %445 = vmatmul.f32.gmra.mxu0 %v234
    %v446 = vpop.f32.mrf.mxu0
    %v447 = vadd.f32 %v92, %v446
    %448 = vmatmul.f32.gmra.mxu0 %v237
    %v449 = vpop.f32.mrf.mxu0
    %v450 = vadd.f32 %v92, %v449
    %451 = vmatmul.f32.gmra.mxu0 %v240
    %v452 = vpop.f32.mrf.mxu0
    %v453 = vadd.f32 %v92, %v452
    %454 = vmatmul.f32.gmra.mxu0 %v243
    %v455 = vpop.f32.mrf.mxu0
    %v456 = vadd.f32 %v92, %v455
    %457 = vmatmul.f32.gmra.mxu0 %v246
    %v458 = vpop.f32.mrf.mxu0
    %v459 = vadd.f32 %v92, %v458
    %460 = vmatmul.f32.gmra.mxu0 %v249
    %v461 = vpop.f32.mrf.mxu0
    %v462 = vadd.f32 %v92, %v461
    %463 = vmatmul.f32.gmra.mxu0 %v252
    %v464 = vpop.f32.mrf.mxu0
    %v465 = vadd.f32 %v92, %v464
    %466 = vmatmul.f32.gmra.mxu0 %v255
    %v467 = vpop.f32.mrf.mxu0
    %v468 = vadd.f32 %v92, %v467
    %469 = vmatmul.f32.gmra.mxu0 %v258
    %v470 = vpop.f32.mrf.mxu0
    %v471 = vadd.f32 %v92, %v470
    %472 = vmatmul.f32.gmra.mxu0 %v261
    %v473 = vpop.f32.mrf.mxu0
    %v474 = vadd.f32 %v92, %v473
    %475 = vmatmul.f32.gmra.mxu0 %v264
    %v476 = vpop.f32.mrf.mxu0
    %v477 = vadd.f32 %v92, %v476
    %478 = vmatmul.f32.gmra.mxu0 %v267
    %v479 = vpop.f32.mrf.mxu0
    %v480 = vadd.f32 %v92, %v479
    %481 = vmatmul.f32.gmra.mxu0 %v270
    %v482 = vpop.f32.mrf.mxu0
    %v483 = vadd.f32 %v92, %v482
    %484 = vmatmul.f32.gmra.mxu0 %v273
    %v485 = vpop.f32.mrf.mxu0
    %v486 = vadd.f32 %v92, %v485
    %487 = vmatmul.f32.gmra.mxu0 %v276
    %v488 = vpop.f32.mrf.mxu0
    %v489 = vadd.f32 %v92, %v488
    %490 = vmatmul.f32.gmra.mxu0 %v279
    %v491 = vpop.f32.mrf.mxu0
    %v492 = vadd.f32 %v92, %v491
    %493 = vmatmul.f32.gmra.mxu0 %v282
    %v494 = vpop.f32.mrf.mxu0
    %v495 = vadd.f32 %v92, %v494
    %496 = vmatmul.f32.gmra.mxu0 %v285
    %v497 = vpop.f32.mrf.mxu0
    %v498 = vadd.f32 %v92, %v497
    %499 = vdwg.mxu0
    %v500 = vmax.f32 %v309, 0.0
    %v501 = vmax.f32 %v312, 0.0
    %v502 = vmax.f32 %v315, 0.0
    %v503 = vmax.f32 %v318, 0.0
    %v504 = vmax.f32 %v321, 0.0
    %v505 = vmax.f32 %v324, 0.0
    %v506 = vmax.f32 %v327, 0.0
    %v507 = vmax.f32 %v330, 0.0
    %v508 = vmax.f32 %v333, 0.0
    %v509 = vmax.f32 %v336, 0.0
    %v510 = vmax.f32 %v339, 0.0
    %v511 = vmax.f32 %v342, 0.0
    %v512 = vmax.f32 %v345, 0.0
    %v513 = vmax.f32 %v348, 0.0
    %v514 = vmax.f32 %v351, 0.0
    %v515 = vmax.f32 %v354, 0.0
    %v516 = vmax.f32 %v357, 0.0
    %v517 = vmax.f32 %v360, 0.0
    %v518 = vmax.f32 %v363, 0.0
    %v519 = vmax.f32 %v366, 0.0
    %v520 = vmax.f32 %v369, 0.0
    %v521 = vmax.f32 %v372, 0.0
    %v522 = vmax.f32 %v375, 0.0
    %v523 = vmax.f32 %v378, 0.0
    %v524 = vmax.f32 %v381, 0.0
    %v525 = vmax.f32 %v384, 0.0
    %v526 = vmax.f32 %v387, 0.0
    %v527 = vmax.f32 %v390, 0.0
    %v528 = vmax.f32 %v393, 0.0
    %v529 = vmax.f32 %v396, 0.0
    %v530 = vmax.f32 %v399, 0.0
    %v531 = vmax.f32 %v402, 0.0
    %v532 = vmax.f32 %v405, 0.0
    %v533 = vmax.f32 %v408, 0.0
    %v534 = vmax.f32 %v411, 0.0
    %v535 = vmax.f32 %v414, 0.0
    %v536 = vmax.f32 %v417, 0.0
    %v537 = vmax.f32 %v420, 0.0
    %v538 = vmax.f32 %v423, 0.0
    %v539 = vmax.f32 %v426, 0.0
    %v540 = vmax.f32 %v429, 0.0
    %v541 = vmax.f32 %v432, 0.0
    %v542 = vmax.f32 %v435, 0.0
    %v543 = vmax.f32 %v438, 0.0
    %v544 = vmax.f32 %v441, 0.0
    %v545 = vmax.f32 %v444, 0.0
    %v546 = vmax.f32 %v447, 0.0
    %v547 = vmax.f32 %v450, 0.0
    %v548 = vmax.f32 %v453, 0.0
    %v549 = vmax.f32 %v456, 0.0
    %v550 = vmax.f32 %v459, 0.0
    %v551 = vmax.f32 %v462, 0.0
    %v552 = vmax.f32 %v465, 0.0
    %v553 = vmax.f32 %v468, 0.0
    %v554 = vmax.f32 %v471, 0.0
    %v555 = vmax.f32 %v474, 0.0
    %v556 = vmax.f32 %v477, 0.0
    %v557 = vmax.f32 %v480, 0.0
    %v558 = vmax.f32 %v483, 0.0
    %v559 = vmax.f32 %v486, 0.0
    %v560 = vmax.f32 %v489, 0.0
    %v561 = vmax.f32 %v492, 0.0
    %v562 = vmax.f32 %v495, 0.0
    %v563 = vmax.f32 %v498, 0.0
    %vm564 = vcmask 261120
    %v565 = vsel %vm564, %v500, 0.0
    %v566 = vsel %vm564, %v501, 0.0
    %v567 = vadd.f32 %v565, %v566
    %v568 = vsel %vm564, %v502, 0.0
    %v569 = vadd.f32 %v567, %v568
    %v570 = vsel %vm564, %v503, 0.0
    %v571 = vadd.f32 %v569, %v570
    %v572 = vsel %vm564, %v504, 0.0
    %v573 = vadd.f32 %v571, %v572
    %v574 = vsel %vm564, %v505, 0.0
    %v575 = vadd.f32 %v573, %v574
    %v576 = vsel %vm564, %v506, 0.0
    %v577 = vadd.f32 %v575, %v576
    %v578 = vsel %vm564, %v507, 0.0
    %v579 = vadd.f32 %v577, %v578
    %v580 = vsel %vm564, %v508, 0.0
    %v581 = vadd.f32 %v579, %v580
    %v582 = vsel %vm564, %v509, 0.0
    %v583 = vadd.f32 %v581, %v582
    %v584 = vsel %vm564, %v510, 0.0
    %v585 = vadd.f32 %v583, %v584
    %v586 = vsel %vm564, %v511, 0.0
    %v587 = vadd.f32 %v585, %v586
    %v588 = vsel %vm564, %v512, 0.0
    %v589 = vadd.f32 %v587, %v588
    %v590 = vsel %vm564, %v513, 0.0
    %v591 = vadd.f32 %v589, %v590
    %v592 = vsel %vm564, %v514, 0.0
    %v593 = vadd.f32 %v591, %v592
    %v594 = vsel %vm564, %v515, 0.0
    %v595 = vadd.f32 %v593, %v594
    %v596 = vsel %vm564, %v516, 0.0
    %v597 = vadd.f32 %v595, %v596
    %v598 = vsel %vm564, %v517, 0.0
    %v599 = vadd.f32 %v597, %v598
    %v600 = vsel %vm564, %v518, 0.0
    %v601 = vadd.f32 %v599, %v600
    %v602 = vsel %vm564, %v519, 0.0
    %v603 = vadd.f32 %v601, %v602
    %v604 = vsel %vm564, %v520, 0.0
    %v605 = vadd.f32 %v603, %v604
    %v606 = vsel %vm564, %v521, 0.0
    %v607 = vadd.f32 %v605, %v606
    %v608 = vsel %vm564, %v522, 0.0
    %v609 = vadd.f32 %v607, %v608
    %v610 = vsel %vm564, %v523, 0.0
    %v611 = vadd.f32 %v609, %v610
    %v612 = vsel %vm564, %v524, 0.0
    %v613 = vadd.f32 %v611, %v612
    %v614 = vsel %vm564, %v525, 0.0
    %v615 = vadd.f32 %v613, %v614
    %v616 = vsel %vm564, %v526, 0.0
    %v617 = vadd.f32 %v615, %v616
    %v618 = vsel %vm564, %v527, 0.0
    %v619 = vadd.f32 %v617, %v618
    %v620 = vsel %vm564, %v528, 0.0
    %v621 = vadd.f32 %v619, %v620
    %v622 = vsel %vm564, %v529, 0.0
    %v623 = vadd.f32 %v621, %v622
    %v624 = vsel %vm564, %v530, 0.0
    %v625 = vadd.f32 %v623, %v624
    %v626 = vsel %vm564, %v531, 0.0
    %v627 = vadd.f32 %v625, %v626
    %v628 = vrot.slane %v627, 4
    %v629 = vadd.f32 %v627, %v628
    %v630 = vrot.slane %v629, 2
    %v631 = vadd.f32 %v629, %v630
    %v632 = vrot.slane %v631, 1
    %v633 = vadd.f32 %v631, %v632
    %v634 = vsel %vm564, %v532, 0.0
    %v635 = vsel %vm564, %v533, 0.0
    %v636 = vadd.f32 %v634, %v635
    %v637 = vsel %vm564, %v534, 0.0
    %v638 = vadd.f32 %v636, %v637
    %v639 = vsel %vm564, %v535, 0.0
    %v640 = vadd.f32 %v638, %v639
    %v641 = vsel %vm564, %v536, 0.0
    %v642 = vadd.f32 %v640, %v641
    %v643 = vsel %vm564, %v537, 0.0
    %v644 = vadd.f32 %v642, %v643
    %v645 = vsel %vm564, %v538, 0.0
    %v646 = vadd.f32 %v644, %v645
    %v647 = vsel %vm564, %v539, 0.0
    %v648 = vadd.f32 %v646, %v647
    %v649 = vsel %vm564, %v540, 0.0
    %v650 = vadd.f32 %v648, %v649
    %v651 = vsel %vm564, %v541, 0.0
    %v652 = vadd.f32 %v650, %v651
    %v653 = vsel %vm564, %v542, 0.0
    %v654 = vadd.f32 %v652, %v653
    %v655 = vsel %vm564, %v543, 0.0
    %v656 = vadd.f32 %v654, %v655
    %v657 = vsel %vm564, %v544, 0.0
    %v658 = vadd.f32 %v656, %v657
    %v659 = vsel %vm564, %v545, 0.0
    %v660 = vadd.f32 %v658, %v659
    %v661 = vsel %vm564, %v546, 0.0
    %v662 = vadd.f32 %v660, %v661
    %v663 = vsel %vm564, %v547, 0.0
    %v664 = vadd.f32 %v662, %v663
    %v665 = vsel %vm564, %v548, 0.0
    %v666 = vadd.f32 %v664, %v665
    %v667 = vsel %vm564, %v549, 0.0
    %v668 = vadd.f32 %v666, %v667
    %v669 = vsel %vm564, %v550, 0.0
    %v670 = vadd.f32 %v668, %v669
    %v671 = vsel %vm564, %v551, 0.0
    %v672 = vadd.f32 %v670, %v671
    %v673 = vsel %vm564, %v552, 0.0
    %v674 = vadd.f32 %v672, %v673
    %v675 = vsel %vm564, %v553, 0.0
    %v676 = vadd.f32 %v674, %v675
    %v677 = vsel %vm564, %v554, 0.0
    %v678 = vadd.f32 %v676, %v677
    %v679 = vsel %vm564, %v555, 0.0
    %v680 = vadd.f32 %v678, %v679
    %v681 = vsel %vm564, %v556, 0.0
    %v682 = vadd.f32 %v680, %v681
    %v683 = vsel %vm564, %v557, 0.0
    %v684 = vadd.f32 %v682, %v683
    %v685 = vsel %vm564, %v558, 0.0
    %v686 = vadd.f32 %v684, %v685
    %v687 = vsel %vm564, %v559, 0.0
    %v688 = vadd.f32 %v686, %v687
    %v689 = vsel %vm564, %v560, 0.0
    %v690 = vadd.f32 %v688, %v689
    %v691 = vsel %vm564, %v561, 0.0
    %v692 = vadd.f32 %v690, %v691
    %v693 = vsel %vm564, %v562, 0.0
    %v694 = vadd.f32 %v692, %v693
    %v695 = vsel %vm564, %v563, 0.0
    %v696 = vadd.f32 %v694, %v695
    %v697 = vrot.slane %v696, 4
    %v698 = vadd.f32 %v696, %v697
    %v699 = vrot.slane %v698, 2
    %v700 = vadd.f32 %v698, %v699
    %v701 = vrot.slane %v700, 1
    %v702 = vadd.f32 %v700, %v701
    %v703 = vmul.f32 %v633, 0.00390625
    %v704 = vmul.f32 %v702, 0.00390625
    %v705 = vld [vmem:[%s3] sm:$0xff]
    %v706 = vld [vmem:[%s3 + $0x8] sm:$0xff]
    %v707 = vld [vmem:[%s3 + $0x10] sm:$0xff]
    %v708 = vld [vmem:[%s3 + $0x18] sm:$0xff]
    %v709 = vld [vmem:[%s4] sm:$0x1]
    %v711 = vperm.slane %v709, 0
    %vm715 = vcmask 1041409
    %v716 = vsel %vm715, %v704, %v703
    %v717 = vsel %vm564, %v716, 0
    %719 = vmatpush.msra.mxu0 0.0
    %720 = vmatpush.msra.mxu0 0.0
    %721 = vmatpush.msra.mxu0 0.0
    %722 = vmatpush.msra.mxu0 0.0
    %723 = vmatpush.msra.mxu0 0.0
    %724 = vmatpush.msra.mxu0 0.0
    %725 = vmatpush.msra.mxu0 0.0
    %726 = vmatpush.msra.mxu0 0.0
    %727 = vmatpush.msra.mxu0 0.0
    %728 = vmatpush.msra.mxu0 0.0
    %729 = vmatpush.msra.mxu0 0.0
    %730 = vmatpush.msra.mxu0 0.0
    %731 = vmatpush.msra.mxu0 %v708
    %732 = vmatpush.msra.mxu0 %v707
    %733 = vmatpush.msra.mxu0 %v706
    %734 = vmatpush.msra.mxu0 %v705
    %735 = vmatmul.f32.gmra.mxu0 %v717
    %v736 = vpop.f32.mrf.mxu0
    %v737 = vadd.f32 %v711, %v736
    %738 = vdwg.mxu0
    %739 = vst [vmem:[#allocation2] sm:$0x3] %v737
    // Predicated region
    $region22: #{model_wrapper_forward.1} parent=1 // pred_check
      _
    $region23: #{model_wrapper_forward.1} parent=1 // pred_check_branch
      %741 = sbr.rel (0) target = $region25
    $region24: #{model_wrapper_forward.1} parent=1 // pred_region
      %743 = vsyncadd [#allocation3], 0
      %s745 = sshll.u32 [#allocation2], 4
      %s746 = int_to_ptr.vmem [resolvable:$true] %s745
      %s747 = sshll.u32 %s5, 4
      %s748 = int_to_ptr.hbm [resolvable:$true] %s747
      %750 = dma.vmem_to_hbm [thread:$0]  %s746, 32, %s748, [#allocation3]
    $region25: #{model_wrapper_forward.1} parent=1 // pred_fallthru
      _
    // Predicated region
    $region26: #{model_wrapper_forward.1} parent=1 // pred_check
      _
    $region27: #{model_wrapper_forward.1} parent=1 // pred_check_branch
      %752 = sbr.rel (0) target = $region29
    $region28: #{model_wrapper_forward.1} parent=1 // pred_region
      %754 = dma.done [#allocation3], 32
    $region29: #{model_wrapper_forward.1} parent=1 // pred_fallthru
      _
    %755 = vsyncpa [#allocation3], 1

</llo_original>
